<compile_context>
chip_gen: v7x
topology: tpu7x:2x2x1
jax: 0.10.0
libtpu: 0.0.40
codegen_flags: <defaults>
</compile_context>

<pallas_src>
import jax
import jax.numpy as jnp
from jax.experimental import pallas as pl
from jax.experimental.pallas import tpu as pltpu

EPS = 1e-6
_TILE_CANDIDATES = (8192, 4096, 2048, 1024, 512, 256, 128)
_TILE_VMEM_BUDGET = 2 * 1024 * 1024  # bytes per logits tile (x2 for dbl-buffer)


def _pick_tile(l_pad, c, itemsize):
    """Largest candidate tile that divides l_pad and fits the VMEM budget."""
    best = 128
    for t in _TILE_CANDIDATES:
        if l_pad % t == 0 and c * t * itemsize <= _TILE_VMEM_BUDGET:
            best = t
            break
    return min(best, l_pad)


def _make_kernel(l_true, needs_mask):
    """Kernel closure over the static true sequence length."""

    def kernel(x_ref, t_ref, p_out_ref, lp_out_ref):
        li = pl.program_id(1)

        # Init per-batch accumulators on the first L tile.
        @pl.when(li == 0)
        def _():
            p_out_ref[...] = jnp.zeros_like(p_out_ref)
            lp_out_ref[...] = jnp.zeros_like(lp_out_ref)

        x = x_ref[0].astype(jnp.float32)        # (C, tile_L), f32 compute
        tgt = t_ref[0]                          # (1, tile_L) int32
        c, tile_l = x.shape

        # Target-class mask (bool, never materialized as f32 one-hot).
        cls = jax.lax.broadcasted_iota(jnp.int32, (c, tile_l), 0)
        tmask = cls == tgt                      # (C, tile_L)

        # Stable log-softmax pieces; only target-class quantities are formed.
        m = jnp.max(x, axis=0, keepdims=True)                  # (1, tile_L)
        shifted = x - m                                         # (C, tile_L)
        s = jnp.sum(jnp.exp(shifted), axis=0, keepdims=True)    # (1, tile_L)
        shifted_t = jnp.sum(jnp.where(tmask, shifted, 0.0),
                            axis=0, keepdims=True)              # (1, tile_L)
        logp_t = shifted_t - jnp.log(s)                         # log p[target]
        p_t = jnp.exp(logp_t)                                   # p[target]

        if needs_mask:
            pos = li * tile_l + jax.lax.broadcasted_iota(
                jnp.int32, (1, tile_l), 1)
            valid = pos < l_true
            p_t = jnp.where(valid, p_t, 0.0)
            logp_t = jnp.where(valid, logp_t, 0.0)

        # One cross-lane reduce per tile; accumulate scalars (broadcast over
        # the lane-aligned output block, wrapper reads element [0, 0]).
        p_out_ref[...] += jnp.sum(p_t)
        lp_out_ref[...] += jnp.sum(logp_t)

    return kernel


def dice_bce_loss(logits, target, *, eps=EPS):
    """Forward pass of the PyTorch DiceBCELoss module."""
    n, c, l = logits.shape
    target = target.astype(jnp.int32)

    # Pad L up to a multiple of 128 (tail masked inside the kernel).
    l_pad = ((l + 127) // 128) * 128
    if l_pad != l:
        logits = jnp.pad(logits, ((0, 0), (0, 0), (0, l_pad - l)))
        target = jnp.pad(target, ((0, 0), (0, l_pad - l)))
    tile_l = _pick_tile(l_pad, c, jnp.dtype(logits.dtype).itemsize)
    needs_mask = l_pad != l

    target3 = target.reshape(n, 1, l_pad)

    kernel = _make_kernel(l, needs_mask)
    p_part, lp_part = pl.pallas_call(
        kernel,
        out_shape=(
            jax.ShapeDtypeStruct((n, 8, 128), jnp.float32),
            jax.ShapeDtypeStruct((n, 8, 128), jnp.float32),
        ),
        grid_spec=pltpu.PrefetchScalarGridSpec(
            num_scalar_prefetch=0,
            grid=(n, l_pad // tile_l),
            in_specs=[
                pl.BlockSpec((1, c, tile_l), lambda i, j: (i, 0, j)),
                pl.BlockSpec((1, 1, tile_l), lambda i, j: (i, 0, j)),
            ],
            out_specs=[
                pl.BlockSpec((1, 8, 128), lambda i, j: (i, 0, 0)),
                pl.BlockSpec((1, 8, 128), lambda i, j: (i, 0, 0)),
            ],
        ),
        compiler_params=pltpu.CompilerParams(
            dimension_semantics=("parallel", "arbitrary")),
    )(logits, target3)

    # Tiny finalize in plain JAX (per-batch partials -> scalar loss).
    inter = p_part[:, 0, 0]                      # (N,) sum of target-class probs
    lp_sum = lp_part[:, 0, 0]                    # (N,) sum of target-class log-probs
    # cardinality == 2*L exactly for softmax + in-range one-hot targets.
    card = 2.0 * l
    dice_score = 2.0 * inter / (card + eps)
    dice_loss = jnp.mean(1.0 - dice_score)
    ce = -jnp.sum(lp_sum) / (n * l)
    return dice_loss * 0.2 + ce * 0.8


def ref_dice_bce_loss(logits, target, eps=EPS):
    """Pure-JAX reference mirroring the PyTorch module line by line."""
    logits = logits.astype(jnp.float32)
    soft = jax.nn.softmax(logits, axis=1)                          # (N, C, L)
    soft_t = jnp.swapaxes(soft, 1, 2)                              # (N, L, C)
    onehot = jax.nn.one_hot(target, logits.shape[1], axis=-1,
                            dtype=jnp.float32)                     # (N, L, C)
    inter = jnp.sum(soft_t * onehot, axis=(1, 2))
    card = jnp.sum(soft_t + onehot, axis=(1, 2))
    dice_score = 2.0 * inter / (card + eps)
    dice_loss = jnp.mean(1.0 - dice_score)
    logp = jax.nn.log_softmax(logits, axis=1)                      # (N, C, L)
    picked = jnp.take_along_axis(logp, target[:, None, :], axis=1)  # (N, 1, L)
    ce = -jnp.mean(picked)
    return dice_loss * 0.2 + ce * 0.8


if __name__ == "__main__":
    key = jax.random.PRNGKey(0)
    k1, k2, k3, k4, k5, k6 = jax.random.split(key, 6)

    loss_fn = jax.jit(dice_bce_loss)

    # Case 1: module-default small shapes, f32, ragged L (exercises masking).
    N, C, L = 2, 4, 16
    logits = jax.random.normal(k1, (N, C, L), dtype=jnp.float32)
    target = jax.random.randint(k2, (N, L), 0, C, dtype=jnp.int32)
    loss = loss_fn(logits, target)
    jax.block_until_ready(loss)
    ref = ref_dice_bce_loss(logits, target)
    assert jnp.allclose(loss, ref, rtol=1e-5, atol=1e-5), (loss, ref)

    # Case 2: lane-aligned L, non-power-of-two class count, f32.
    N2, C2, L2 = 2, 5, 256
    logits2 = jax.random.normal(k3, (N2, C2, L2), dtype=jnp.float32)
    target2 = jax.random.randint(k4, (N2, L2), 0, C2, dtype=jnp.int32)
    loss2 = loss_fn(logits2, target2)
    jax.block_until_ready(loss2)
    ref2 = ref_dice_bce_loss(logits2, target2)
    assert jnp.allclose(loss2, ref2, rtol=1e-5, atol=1e-5), (loss2, ref2)

    # Case 3: bf16 over HBM (half the DMA bytes), f32 compute inside the kernel.
    logits_bf16 = logits.astype(jnp.bfloat16)
    loss3 = loss_fn(logits_bf16, target)
    jax.block_until_ready(loss3)
    ref3 = ref_dice_bce_loss(logits_bf16.astype(jnp.float32), target)
    assert jnp.allclose(loss3, ref3, rtol=1e-4, atol=1e-4), (loss3, ref3)

    # Case 4: multi-tile L axis (exercises the accumulator across L tiles).
    N4, C4, L4 = 2, 4, 1024
    logits4 = jax.random.normal(k5, (N4, C4, L4), dtype=jnp.float32)
    target4 = jax.random.randint(k6, (N4, L4), 0, C4, dtype=jnp.int32)
    loss4 = loss_fn(logits4, target4)
    jax.block_until_ready(loss4)
    ref4 = ref_dice_bce_loss(logits4, target4)
    assert jnp.allclose(loss4, ref4, rtol=1e-5, atol=1e-5), (loss4, ref4)

    print("KERNEL_OK")
</pallas_src>

<mosaic_0001>
module attributes {stable_mosaic.version = 11 : i64} {
  func.func @kernel(%arg0: i32, %arg1: i32, %arg2: memref<1x4x128xf32, #tpu.memory_space<vmem>>, %arg3: memref<1x1x128xi32, #tpu.memory_space<vmem>>, %arg4: memref<1x8x128xf32, #tpu.memory_space<vmem>>, %arg5: memref<1x8x128xf32, #tpu.memory_space<vmem>>) attributes {dimension_semantics = [#tpu.dimension_semantics<parallel>, #tpu.dimension_semantics<arbitrary>], iteration_bounds = array<i64: 2, 1>, scalar_prefetch = 0 : i64, scratch_operands = 0 : i64, tpu.core_type = #tpu.core_type<tc>, window_params = [{transform_indices = @transform_0, window_bounds = array<i64: 1, 4, 128>}, {transform_indices = @transform_1, window_bounds = array<i64: 1, 1, 128>}, {transform_indices = @transform_2, window_bounds = array<i64: 1, 8, 128>}, {transform_indices = @transform_3, window_bounds = array<i64: 1, 8, 128>}]} {
    %c0_i32 = arith.constant 0 : i32
    %0 = arith.cmpi eq, %arg1, %c0_i32 : i32
    %1 = arith.extui %0 : i1 to i32
    %c0_i32_0 = arith.constant 0 : i32
    %2 = arith.cmpi ne, %1, %c0_i32_0 : i32
    scf.if %2 {
      %cst_25 = arith.constant 0.000000e+00 : f32
      %50 = vector.broadcast %cst_25 : f32 to vector<1x8x128xf32>
      %c0_26 = arith.constant 0 : index
      %c0_27 = arith.constant 0 : index
      %c0_28 = arith.constant 0 : index
      %51 = vector.load %arg4[%c0_26, %c0_27, %c0_28] : memref<1x8x128xf32, #tpu.memory_space<vmem>>, vector<1x8x128xf32>
      tpu.vector_store %arg4[%c0_26, %c0_27, %c0_28], %50 {strides = array<i32>} : memref<1x8x128xf32, #tpu.memory_space<vmem>>, vector<1x8x128xf32>,
      %cst_29 = arith.constant 0.000000e+00 : f32
      %52 = vector.broadcast %cst_29 : f32 to vector<1x8x128xf32>
      %c0_30 = arith.constant 0 : index
      %c0_31 = arith.constant 0 : index
      %c0_32 = arith.constant 0 : index
      %53 = vector.load %arg5[%c0_30, %c0_31, %c0_32] : memref<1x8x128xf32, #tpu.memory_space<vmem>>, vector<1x8x128xf32>
      tpu.vector_store %arg5[%c0_30, %c0_31, %c0_32], %52 {strides = array<i32>} : memref<1x8x128xf32, #tpu.memory_space<vmem>>, vector<1x8x128xf32>,
    } else {
    }
    %c0 = arith.constant 0 : index
    %c0_1 = arith.constant 0 : index
    %c0_2 = arith.constant 0 : index
    %3 = vector.load %arg2[%c0, %c0_1, %c0_2] : memref<1x4x128xf32, #tpu.memory_space<vmem>>, vector<1x4x128xf32>
    %4 = vector.shape_cast %3 : vector<1x4x128xf32> to vector<4x128xf32>
    %c0_3 = arith.constant 0 : index
    %c0_4 = arith.constant 0 : index
    %c0_5 = arith.constant 0 : index
    %5 = vector.load %arg3[%c0_3, %c0_4, %c0_5] : memref<1x1x128xi32, #tpu.memory_space<vmem>>, vector<1x1x128xi32>
    %6 = vector.shape_cast %5 : vector<1x1x128xi32> to vector<1x128xi32>
    %7 = tpu.iota {dimensions = array<i32: 0>} : vector<4x128xi32>
    %8 = vector.broadcast %6 : vector<1x128xi32> to vector<4x128xi32>
    %9 = arith.cmpi eq, %7, %8 : vector<4x128xi32>
    %cst = arith.constant dense<0xFF800000> : vector<128xf32>
    %10 = vector.multi_reduction <maximumf>, %4, %cst [0] : vector<4x128xf32> to vector<128xf32>
    %11 = vector.shape_cast %10 : vector<128xf32> to vector<1x128xf32>
    %12 = vector.broadcast %11 : vector<1x128xf32> to vector<4x128xf32>
    %13 = arith.subf %4, %12 : vector<4x128xf32>
    %14 = math.exp %13 : vector<4x128xf32>
    %cst_6 = arith.constant dense<0.000000e+00> : vector<128xf32>
    %15 = vector.multi_reduction <add>, %14, %cst_6 [0] : vector<4x128xf32> to vector<128xf32>
    %16 = vector.shape_cast %15 : vector<128xf32> to vector<1x128xf32>
    %cst_7 = arith.constant 0.000000e+00 : f32
    %17 = vector.broadcast %cst_7 : f32 to vector<4x128xf32>
    %18 = arith.select %9, %13, %17 : vector<4x128xi1>, vector<4x128xf32>
    %cst_8 = arith.constant dense<0.000000e+00> : vector<128xf32>
    %19 = vector.multi_reduction <add>, %18, %cst_8 [0] : vector<4x128xf32> to vector<128xf32>
    %20 = vector.shape_cast %19 : vector<128xf32> to vector<1x128xf32>
    %21 = math.log %16 : vector<1x128xf32>
    %22 = arith.subf %20, %21 : vector<1x128xf32>
    %23 = math.exp %22 : vector<1x128xf32>
    %c128_i32 = arith.constant 128 : i32
    %24 = arith.muli %arg1, %c128_i32 : i32
    %25 = tpu.iota {dimensions = array<i32: 1>} : vector<1x128xi32>
    %26 = vector.broadcast %24 : i32 to vector<1x128xi32>
    %27 = arith.addi %26, %25 : vector<1x128xi32>
    %c16_i32 = arith.constant 16 : i32
    %28 = vector.broadcast %c16_i32 : i32 to vector<1x128xi32>
    %29 = arith.cmpi slt, %27, %28 : vector<1x128xi32>
    %cst_9 = arith.constant 0.000000e+00 : f32
    %30 = vector.broadcast %cst_9 : f32 to vector<1x128xf32>
    %31 = arith.select %29, %23, %30 : vector<1x128xi1>, vector<1x128xf32>
    %cst_10 = arith.constant 0.000000e+00 : f32
    %32 = vector.broadcast %cst_10 : f32 to vector<1x128xf32>
    %33 = arith.select %29, %22, %32 : vector<1x128xi1>, vector<1x128xf32>
    %c0_11 = arith.constant 0 : index
    %c0_12 = arith.constant 0 : index
    %c0_13 = arith.constant 0 : index
    %34 = vector.load %arg4[%c0_11, %c0_12, %c0_13] : memref<1x8x128xf32, #tpu.memory_space<vmem>>, vector<1x8x128xf32>
    %35 = vector.shape_cast %31 : vector<1x128xf32> to vector<1x1x128xf32>
    %cst_14 = arith.constant dense<0.000000e+00> : vector<1xf32>
    %36 = vector.multi_reduction <add>, %35, %cst_14 [1, 2] : vector<1x1x128xf32> to vector<1xf32>
    %37 = vector.shape_cast %36 : vector<1xf32> to vector<1x1x1xf32>
    %38 = vector.extract %37[0, 0, 0] : f32 from vector<1x1x1xf32>
    %39 = vector.broadcast %38 : f32 to vector<1x8x128xf32>
    %40 = arith.addf %34, %39 : vector<1x8x128xf32>
    %c0_15 = arith.constant 0 : index
    %c0_16 = arith.constant 0 : index
    %c0_17 = arith.constant 0 : index
    %41 = vector.load %arg4[%c0_15, %c0_16, %c0_17] : memref<1x8x128xf32, #tpu.memory_space<vmem>>, vector<1x8x128xf32>
    tpu.vector_store %arg4[%c0_15, %c0_16, %c0_17], %40 {strides = array<i32>} : memref<1x8x128xf32, #tpu.memory_space<vmem>>, vector<1x8x128xf32>,
    %c0_18 = arith.constant 0 : index
    %c0_19 = arith.constant 0 : index
    %c0_20 = arith.constant 0 : index
    %42 = vector.load %arg5[%c0_18, %c0_19, %c0_20] : memref<1x8x128xf32, #tpu.memory_space<vmem>>, vector<1x8x128xf32>
    %43 = vector.shape_cast %33 : vector<1x128xf32> to vector<1x1x128xf32>
    %cst_21 = arith.constant dense<0.000000e+00> : vector<1xf32>
    %44 = vector.multi_reduction <add>, %43, %cst_21 [1, 2] : vector<1x1x128xf32> to vector<1xf32>
    %45 = vector.shape_cast %44 : vector<1xf32> to vector<1x1x1xf32>
    %46 = vector.extract %45[0, 0, 0] : f32 from vector<1x1x1xf32>
    %47 = vector.broadcast %46 : f32 to vector<1x8x128xf32>
    %48 = arith.addf %42, %47 : vector<1x8x128xf32>
    %c0_22 = arith.constant 0 : index
    %c0_23 = arith.constant 0 : index
    %c0_24 = arith.constant 0 : index
    %49 = vector.load %arg5[%c0_22, %c0_23, %c0_24] : memref<1x8x128xf32, #tpu.memory_space<vmem>>, vector<1x8x128xf32>
    tpu.vector_store %arg5[%c0_22, %c0_23, %c0_24], %48 {strides = array<i32>} : memref<1x8x128xf32, #tpu.memory_space<vmem>>, vector<1x8x128xf32>,
    return
  }
  func.func @transform_0(%arg0: i32, %arg1: i32) -> (i32, i32, i32) {
    %c0_i32 = arith.constant 0 : i32
    %c0_i32_0 = arith.constant 0 : i32
    return %arg0, %c0_i32, %arg1 : i32, i32, i32
  }
  func.func @transform_1(%arg0: i32, %arg1: i32) -> (i32, i32, i32) {
    %c0_i32 = arith.constant 0 : i32
    %c0_i32_0 = arith.constant 0 : i32
    return %arg0, %c0_i32, %arg1 : i32, i32, i32
  }
  func.func @transform_2(%arg0: i32, %arg1: i32) -> (i32, i32, i32) {
    %c0_i32 = arith.constant 0 : i32
    %c0_i32_0 = arith.constant 0 : i32
    %c0_i32_1 = arith.constant 0 : i32
    return %arg0, %c0_i32, %c0_i32_0 : i32, i32, i32
  }
  func.func @transform_3(%arg0: i32, %arg1: i32) -> (i32, i32, i32) {
    %c0_i32 = arith.constant 0 : i32
    %c0_i32_0 = arith.constant 0 : i32
    %c0_i32_1 = arith.constant 0 : i32
    return %arg0, %c0_i32, %c0_i32_0 : i32, i32, i32
  }
}

</mosaic_0001>

<llo_original>
// kernel: dice_bce_loss.1
$region0: #{dice_bce_loss.1}
  #allocation0 [shape = 'u32[]', space=smem, size = 0x4, offset = 0x4, fixed_abs, tag = 'smem constant byte address 0x4 - core index']
  #allocation1 [shape = 'u32[144,128]{1,0:T(1,128)}', space=vmem, size = 0x12000, scoped, tag = 'internal scratch']
  %s0 = inlined_call_operand.vmem [shape: f32[2,4,128], index: 0, kind: input, shape index: {}]
  %s1 = inlined_call_operand.vmem [shape: s32[2,1,128], index: 1, kind: input, shape index: {}]
  %s2 = inlined_call_operand.vmem [shape: f32[2,8,128], index: 2, kind: output, shape index: {0}]
  %s3 = inlined_call_operand.vmem [shape: f32[2,8,128], index: 3, kind: output, shape index: {1}]
  %4 = xla_tuple %s2, %s3
  %s5 = sld [smem:[#allocation0]]
  $region53: #{dice_bce_loss.1} parent=0
    _
  %s7 = ssub.s32 1, %s5
  %s8 = scalar_select 0, %s7, %s5
  loop: start=0, step=1, limit=4
  $region2: #{dice_bce_loss.1} parent=0 // loop_pre_header
    _
  $region3: #{dice_bce_loss.1} parent=0 // loop_header
    %s10 = sphi 0, %s14
    %p11 = scmp.ge.s32.totalorder %s10, 4
    %s17 = sphi 0, %s29
    %s18 = sphi 0, %s25
    %s19 = sphi 0, %s17
    %s20 = sphi 0, %s18
    %s21 = sphi 0, %s19
    %s22 = sphi 0, %s20
    %s34 = sphi 0, %s36
    %s37 = sphi 0, %s34
    %s38 = sphi 0, %s37
    %s54 = sphi 0, %s38
    %s62 = sphi 0, %s64
    %s65 = sphi 0, %s62
    %s66 = sphi 0, %s65
    %s82 = sphi 0, %s66
    %s88 = sphi 0, %s90
    %s91 = sphi 0, %s88
    %s92 = sphi 0, %s91
    %s108 = sphi 0, %s92
    %s114 = sphi 0, %s116
    %s117 = sphi 0, %s114
    %s118 = sphi 0, %s117
    %s134 = sphi 0, %s118
  $region4: #{dice_bce_loss.1} parent=0 // loop_header_branch
    %13 = sbr.rel (%p11) target = $region8
  $region5: #{dice_bce_loss.1} parent=0 // loop_body
    %s15 = ssub.s32 %s10, 1
    %s16 = ssub.s32 %s10, 2
    %s23 = sadd.s32 1, %s18
    %p24 = scmp.ge.s32.totalorder %s23, 1
    %s25 = scalar_select %p24, 0, %s23
    %s26 = sadd.s32 1, %s17
    %s27 = scalar_select %p24, %s26, %s17
    %p28 = scmp.ge.s32.totalorder %s27, 2
    %s29 = scalar_select %p28, 0, %s27
    %s30 = ssub.s32 %s17, %s29
    %s31 = ssub.s32 %s18, %s25
    %s32 = sor.u32 %s30, %s31
    %p33 = scmp.eq.s32.totalorder %s32, 0
    %s35 = sadd.s32 %s34, 1
    %s36 = scalar_select %p33, %s34, %s35
    %p39 = pneg %p33
    %p40 = scmp.eq.s32.totalorder %s10, 1
    %p41 = por %p39, %p40
    %p42 = scmp.ne.s32.totalorder %s34, %s37
    %p43 = scmp.eq.s32.totalorder %s10, 0
    %p44 = por %p42, %p43
    %p45 = scmp.ne.s32.totalorder %s34, %s37
    %p46 = scmp.eq.s32.totalorder %s15, 1
    %p47 = por %p45, %p46
    %p48 = scmp.ne.s32.totalorder %s37, %s38
    %p49 = scmp.eq.s32.totalorder %s15, 0
    %p50 = por %p48, %p49
    %p51 = scmp.ne.s32.totalorder %s37, %s38
    %p52 = scmp.eq.s32.totalorder %s16, 1
    %p53 = por %p51, %p52
    %p55 = scmp.ne.s32.totalorder %s38, %s54
    %p56 = scmp.eq.s32.totalorder %s16, 0
    %p57 = por %p55, %p56
    %s58 = ssub.s32 %s17, %s29
    %s59 = ssub.s32 %s18, %s25
    %s60 = sor.u32 %s58, %s59
    %p61 = scmp.eq.s32.totalorder %s60, 0
    %s63 = sadd.s32 %s62, 1
    %s64 = scalar_select %p61, %s62, %s63
    %p67 = pneg %p61
    %p68 = scmp.eq.s32.totalorder %s10, 1
    %p69 = por %p67, %p68
    %p70 = scmp.ne.s32.totalorder %s62, %s65
    %p71 = scmp.eq.s32.totalorder %s10, 0
    %p72 = por %p70, %p71
    %p73 = scmp.ne.s32.totalorder %s62, %s65
    %p74 = scmp.eq.s32.totalorder %s15, 1
    %p75 = por %p73, %p74
    %p76 = scmp.ne.s32.totalorder %s65, %s66
    %p77 = scmp.eq.s32.totalorder %s15, 0
    %p78 = por %p76, %p77
    %p79 = scmp.ne.s32.totalorder %s65, %s66
    %p80 = scmp.eq.s32.totalorder %s16, 1
    %p81 = por %p79, %p80
    %p83 = scmp.ne.s32.totalorder %s66, %s82
    %p84 = scmp.eq.s32.totalorder %s16, 0
    %p85 = por %p83, %p84
    %s86 = ssub.s32 %s17, %s29
    %p87 = scmp.eq.s32.totalorder %s86, 0
    %s89 = sadd.s32 %s88, 1
    %s90 = scalar_select %p87, %s88, %s89
    %p93 = pneg %p87
    %p94 = scmp.eq.s32.totalorder %s10, 1
    %p95 = por %p93, %p94
    %p96 = scmp.ne.s32.totalorder %s88, %s91
    %p97 = scmp.eq.s32.totalorder %s10, 0
    %p98 = por %p96, %p97
    %p99 = scmp.ne.s32.totalorder %s88, %s91
    %p100 = scmp.eq.s32.totalorder %s15, 1
    %p101 = por %p99, %p100
    %p102 = scmp.ne.s32.totalorder %s91, %s92
    %p103 = scmp.eq.s32.totalorder %s15, 0
    %p104 = por %p102, %p103
    %p105 = scmp.ne.s32.totalorder %s91, %s92
    %p106 = scmp.eq.s32.totalorder %s16, 1
    %p107 = por %p105, %p106
    %p109 = scmp.ne.s32.totalorder %s92, %s108
    %p110 = scmp.eq.s32.totalorder %s16, 0
    %p111 = por %p109, %p110
    %s112 = ssub.s32 %s17, %s29
    %p113 = scmp.eq.s32.totalorder %s112, 0
    %s115 = sadd.s32 %s114, 1
    %s116 = scalar_select %p113, %s114, %s115
    %p119 = pneg %p113
    %p120 = scmp.eq.s32.totalorder %s10, 1
    %p121 = por %p119, %p120
    %p122 = scmp.ne.s32.totalorder %s114, %s117
    %p123 = scmp.eq.s32.totalorder %s10, 0
    %p124 = por %p122, %p123
    %p125 = scmp.ne.s32.totalorder %s114, %s117
    %p126 = scmp.eq.s32.totalorder %s15, 1
    %p127 = por %p125, %p126
    %p128 = scmp.ne.s32.totalorder %s117, %s118
    %p129 = scmp.eq.s32.totalorder %s15, 0
    %p130 = por %p128, %p129
    %p131 = scmp.ne.s32.totalorder %s117, %s118
    %p132 = scmp.eq.s32.totalorder %s16, 1
    %p133 = por %p131, %p132
    %p135 = scmp.ne.s32.totalorder %s118, %s134
    %p136 = scmp.eq.s32.totalorder %s16, 0
    %p137 = por %p135, %p136
    %p138 = scmp.le.s32.totalorder 1, %s10
    %p139 = scmp.lt.s32.totalorder %s10, 3
    %p140 = pnand %p138, %p139
    %p141 = pneg %p140
    // Predicated region
    $region9: #{dice_bce_loss.1} parent=5 // pred_check
      _
    $region10: #{dice_bce_loss.1} parent=5 // pred_check_branch
      %143 = sbr.rel (%p140) target = $region12
    $region11: #{dice_bce_loss.1} parent=5 // pred_region
      %s144 = ssub.s32 %s10, 1
    $region12: #{dice_bce_loss.1} parent=5 // pred_fallthru
      _
    %p145 = scmp.lt.s32.totalorder %s10, 2
    // Predicated region
    $region13: #{dice_bce_loss.1} parent=5 // pred_check
      %p146 = pneg %p145
    $region14: #{dice_bce_loss.1} parent=5 // pred_check_branch
      %148 = sbr.rel (%p146) target = $region16
    $region15: #{dice_bce_loss.1} parent=5 // pred_region
      // Predicated region
      $region17: #{dice_bce_loss.1} parent=15 // pred_check
        %p149 = pneg %p44
      $region18: #{dice_bce_loss.1} parent=15 // pred_check_branch
        %151 = sbr.rel (%p149) target = $region20
      $region19: #{dice_bce_loss.1} parent=15 // pred_region
        %p152 = scmp.lt.s32.totalorder %s17, 1
        %s153 = scalar_select %p152, %s17, 1
        %p154 = scmp.lt.s32.totalorder %s18, 0
        %s155 = scalar_select %p154, %s18, 0
        %s156 = sadd.s32 %s155, %s153
        %s157 = smul.addr %s156, 4
        %s158 = scalar_lea.vmem %s0, %s157
      $region20: #{dice_bce_loss.1} parent=15 // pred_fallthru
        _
      // Predicated region
      $region21: #{dice_bce_loss.1} parent=15 // pred_check
        %p159 = pneg %p72
      $region22: #{dice_bce_loss.1} parent=15 // pred_check_branch
        %161 = sbr.rel (%p159) target = $region24
      $region23: #{dice_bce_loss.1} parent=15 // pred_region
        %p162 = scmp.lt.s32.totalorder %s17, 1
        %s163 = scalar_select %p162, %s17, 1
        %p164 = scmp.lt.s32.totalorder %s18, 0
        %s165 = scalar_select %p164, %s18, 0
        %s166 = sadd.s32 %s165, %s163
        %s167 = scalar_lea.vmem %s1, %s166
      $region24: #{dice_bce_loss.1} parent=15 // pred_fallthru
        _
    $region16: #{dice_bce_loss.1} parent=5 // pred_fallthru
      _
    %p168 = scmp.le.s32.totalorder 1, %s10
    %p169 = scmp.lt.s32.totalorder %s10, 3
    %p170 = pnand %p168, %p169
    %p171 = pneg %p170
    // Predicated region
    $region25: #{dice_bce_loss.1} parent=5 // pred_check
      _
    $region26: #{dice_bce_loss.1} parent=5 // pred_check_branch
      %173 = sbr.rel (%p170) target = $region28
    $region27: #{dice_bce_loss.1} parent=5 // pred_region
      %s174 = ssub.s32 %s10, 1
      %p175 = scmp.lt.s32.totalorder %s19, 1
      %s176 = scalar_select %p175, %s19, 1
      %p177 = scmp.lt.s32.totalorder %s20, 0
      %s178 = scalar_select %p177, %s20, 0
      %s179 = sadd.s32 %s178, %s176
      %s180 = smul.addr %s179, 4
      %s181 = scalar_lea.vmem %s0, %s180
      %p182 = pneg %p50
      %p183 = pneg %p47
      %p184 = scmp.lt.s32.totalorder %s19, 1
      %s185 = scalar_select %p184, %s19, 1
      %p186 = scmp.lt.s32.totalorder %s20, 0
      %s187 = scalar_select %p186, %s20, 0
      %s188 = sadd.s32 %s187, %s185
      %s189 = scalar_lea.vmem %s1, %s188
      %p190 = pneg %p78
      %p191 = pneg %p75
      %p192 = pneg %p104
      %p193 = pneg %p101
      %p194 = scmp.lt.s32.totalorder %s19, 1
      %s195 = scalar_select %p194, %s19, 1
      %s196 = smul.addr %s195, 8
      %s197 = scalar_lea.vmem %s2, %s196
      %p198 = pneg %p130
      %p199 = pneg %p127
      %p200 = scmp.lt.s32.totalorder %s19, 1
      %s201 = scalar_select %p200, %s19, 1
      %s202 = smul.addr %s201, 8
      %s203 = scalar_lea.vmem %s3, %s202
      %p204 = scmp.lt.s32.totalorder %s19, 1
      %s205 = scalar_select %p204, %s19, 1
      %p206 = scmp.lt.s32.totalorder %s20, 0
      %s207 = scalar_select %p206, %s20, 0
      %s208 = sadd.s32 %s207, %s205
      %s209 = smul.addr %s208, 4
      %s210 = scalar_lea.vmem %s0, %s209
      %p211 = scmp.lt.s32.totalorder %s19, 1
      %s212 = scalar_select %p211, %s19, 1
      %p213 = scmp.lt.s32.totalorder %s20, 0
      %s214 = scalar_select %p213, %s20, 0
      %s215 = sadd.s32 %s214, %s212
      %s216 = scalar_lea.vmem %s1, %s215
      %p217 = scmp.lt.s32.totalorder %s19, 1
      %s218 = scalar_select %p217, %s19, 1
      %s219 = smul.addr %s218, 8
      %s220 = scalar_lea.vmem %s2, %s219
      %p221 = scmp.lt.s32.totalorder %s19, 1
      %s222 = scalar_select %p221, %s19, 1
      %s223 = smul.addr %s222, 8
      %s224 = scalar_lea.vmem %s3, %s223
      %p225 = scmp.eq.s32.totalorder %s20, 0
      // Predicated region
      $region29: #{dice_bce_loss.1} parent=27 // pred_check
        %p226 = pneg %p225
      $region30: #{dice_bce_loss.1} parent=27 // pred_check_branch
        %228 = sbr.rel (%p226) target = $region32
      $region31: #{dice_bce_loss.1} parent=27 // pred_region
        %229 = vst [vmem:[%s220] sm:$0xff] 0.0
        %230 = vst [vmem:[%s224] sm:$0xff] 0.0
      $region32: #{dice_bce_loss.1} parent=27 // pred_fallthru
        _
      %v231 = vld [vmem:[%s210] sm:$0xf]
      %v232 = vld [vmem:[%s216] sm:$0x1]
      %v233 = vlaneseq
      %v234 = vshrl.u32 %v233, 7
      %v235 = vlaneseq
      %v236 = vshrl.u32 %v235, 7
      %v237 = vsub.s32 0, %v236
      %v238 = vrot.slane %v232, %v237
      %vm239 = vcmp.eq.s32.totalorder %v234, %v238
      %vm240 = vcmask 1043456
      %v241 = vsel %vm240, %v231, -inf
      %v242 = vrot.slane %v241, 4
      %v243 = vmax.f32 %v241, %v242
      %v244 = vrot.slane %v243, 2
      %v245 = vmax.f32 %v243, %v244
      %v246 = vrot.slane %v245, 1
      %v247 = vmax.f32 %v245, %v246
      %v248 = vsub.f32 %v231, %v247
      %v249 = vmul.f32 %v248, 1.442695
      %v250 = vpow.pop %v249
      %v251 = vsel %vm240, %v250, 0.0
      %v252 = vrot.slane %v251, 4
      %v253 = vadd.f32 %v251, %v252
      %v254 = vrot.slane %v253, 2
      %v255 = vadd.f32 %v253, %v254
      %v256 = vrot.slane %v255, 1
      %v257 = vadd.f32 %v255, %v256
      %v258 = vsel %vm239, %v248, 0.0
      %v259 = vsel %vm240, %v258, 0.0
      %v260 = vrot.slane %v259, 4
      %v261 = vadd.f32 %v259, %v260
      %v262 = vrot.slane %v261, 2
      %v263 = vadd.f32 %v261, %v262
      %v264 = vrot.slane %v263, 1
      %v265 = vadd.f32 %v263, %v264
      %v266 = vlog2.pop %v257
      %v267 = vmul.f32 %v266, 0.6931472
      %v268 = vsub.f32 %v265, %v267
      %v269 = vmul.f32 %v268, 1.442695
      %v270 = vpow.pop %v269
      %s271 = smul.u32 %s20, 128
      %v272 = vlaneseq
      %v273 = vand.u32 %v272, 127
      %v274 = vstv %s271
      %v275 = vadd.s32 %v274, %v273
      %vm276 = vcmp.lt.s32.totalorder %v275, 16
      %v277 = vsel %vm276, %v270, 0.0
      %v278 = vsel %vm276, %v268, 0.0
      %v279 = vld [vmem:[%s220] sm:$0xff]
      %vm280 = vcmask 1040384
      %v281 = vsel %vm280, %v277, 0.0
      %282 = vadd.xlane.f32.xlu0 %v281
      %v283 = vpop.xlane.xlu0 %282
      %v284 = vrot.slane %v283, 4
      %v285 = vadd.f32 %v283, %v284
      %v286 = vrot.slane %v285, 2
      %v287 = vadd.f32 %v285, %v286
      %v288 = vrot.slane %v287, 1
      %v289 = vadd.f32 %v287, %v288
      %s290 = vtos %v289
      %v291 = vstv %s290
      %v292 = vadd.f32 %v279, %v291
      %293 = vst [vmem:[%s220] sm:$0xff] %v292
      %v294 = vld [vmem:[%s224] sm:$0xff]
      %v295 = vsel %vm280, %v278, 0.0
      %296 = vadd.xlane.f32.xlu0 %v295
      %v297 = vpop.xlane.xlu0 %296
      %v298 = vrot.slane %v297, 4
      %v299 = vadd.f32 %v297, %v298
      %v300 = vrot.slane %v299, 2
      %v301 = vadd.f32 %v299, %v300
      %v302 = vrot.slane %v301, 1
      %v303 = vadd.f32 %v301, %v302
      %s304 = vtos %v303
      %v305 = vstv %s304
      %v306 = vadd.f32 %v294, %v305
      %307 = vst [vmem:[%s224] sm:$0xff] %v306
      %p308 = scmp.lt.s32.totalorder %s19, 1
      %s309 = scalar_select %p308, %s19, 1
      %s310 = smul.addr %s309, 8
      %s311 = scalar_lea.vmem %s2, %s310
      %p312 = scmp.lt.s32.totalorder %s19, 1
      %s313 = scalar_select %p312, %s19, 1
      %s314 = smul.addr %s313, 8
      %s315 = scalar_lea.vmem %s3, %s314
      // Predicated region
      $region33: #{dice_bce_loss.1} parent=27 // pred_check
        %p316 = pneg %p101
      $region34: #{dice_bce_loss.1} parent=27 // pred_check_branch
        %318 = sbr.rel (%p316) target = $region36
      $region35: #{dice_bce_loss.1} parent=27 // pred_region
        _
      $region36: #{dice_bce_loss.1} parent=27 // pred_fallthru
        _
      // Predicated region
      $region37: #{dice_bce_loss.1} parent=27 // pred_check
        %p319 = pneg %p127
      $region38: #{dice_bce_loss.1} parent=27 // pred_check_branch
        %321 = sbr.rel (%p319) target = $region40
      $region39: #{dice_bce_loss.1} parent=27 // pred_region
        _
      $region40: #{dice_bce_loss.1} parent=27 // pred_fallthru
        _
    $region28: #{dice_bce_loss.1} parent=5 // pred_fallthru
      _
    %p322 = scmp.le.s32.totalorder 2, %s10
    // Predicated region
    $region41: #{dice_bce_loss.1} parent=5 // pred_check
      %p323 = pneg %p322
    $region42: #{dice_bce_loss.1} parent=5 // pred_check_branch
      %325 = sbr.rel (%p323) target = $region44
    $region43: #{dice_bce_loss.1} parent=5 // pred_region
      %s326 = ssub.s32 %s10, 2
      // Predicated region
      $region45: #{dice_bce_loss.1} parent=43 // pred_check
        %p327 = pneg %p107
      $region46: #{dice_bce_loss.1} parent=43 // pred_check_branch
        %329 = sbr.rel (%p327) target = $region48
      $region47: #{dice_bce_loss.1} parent=43 // pred_region
        %p330 = scmp.lt.s32.totalorder %s21, 1
        %s331 = scalar_select %p330, %s21, 1
        %s332 = smul.addr %s331, 8
        %s333 = scalar_lea.vmem %s2, %s332
      $region48: #{dice_bce_loss.1} parent=43 // pred_fallthru
        _
      // Predicated region
      $region49: #{dice_bce_loss.1} parent=43 // pred_check
        %p334 = pneg %p133
      $region50: #{dice_bce_loss.1} parent=43 // pred_check_branch
        %336 = sbr.rel (%p334) target = $region52
      $region51: #{dice_bce_loss.1} parent=43 // pred_region
        %p337 = scmp.lt.s32.totalorder %s21, 1
        %s338 = scalar_select %p337, %s21, 1
        %s339 = smul.addr %s338, 8
        %s340 = scalar_lea.vmem %s3, %s339
      $region52: #{dice_bce_loss.1} parent=43 // pred_fallthru
        _
    $region44: #{dice_bce_loss.1} parent=5 // pred_fallthru
      _
  $region6: #{dice_bce_loss.1} parent=0 // loop_footer
    %s14 = sadd.s32 1, %s10
  $region7: #{dice_bce_loss.1} parent=0 // loop_footer_branch
    %9 = sbr.rel target = $region3
  $region8: #{dice_bce_loss.1} parent=0 // loop_exit
    _

</llo_original>
